<compile_context>
chip_gen: v7x
topology: tpu7x:2x2x1
jax: 0.10.0
libtpu: 0.0.40
codegen_flags: <defaults>
</compile_context>

<pallas_src>
import functools

import jax
import jax.numpy as jnp
from jax.experimental import pallas as pl
from jax.experimental.pallas import tpu as pltpu

_NEG_SENTINEL = -1e30  # finite "minus infinity" for masking the labeled class


def _round_up(x, m):
    return ((x + m - 1) // m) * m


def _margin_body(logits_ref, label_ref, out_ref, acc_ref, *, margin, target,
                 target_label, b_true, block_rows, blocks_per_core):
    p = pl.program_id(0)   # core-split ("parallel") axis
    i = pl.program_id(1)   # batch-block reduction ("arbitrary") axis

    # --- init per-core accumulator on the first reduction step ---------------
    @pl.when(i == 0)
    def _init():
        acc_ref[...] = jnp.zeros_like(acc_ref)

    # --- per-tile compute -----------------------------------------------------
    logits = logits_ref[...]                     # (tb, C), native dtype (f32/bf16)
    tb, c = logits.shape
    cdt = logits.dtype

    class_ids = jax.lax.broadcasted_iota(jnp.int32, (tb, c), 1)
    if target:
        mask = class_ids == target_label          # static class index
    else:
        mask = class_ids == label_ref[...]        # (tb,1) int32 -> broadcast (tb,C)

    # Select/reduce in the native dtype (exact: single-term sum, exact max);
    # on v5e the compiler widens bf16 elementwise internally (correct, slower).
    zero = jnp.asarray(0, cdt)
    neg = jnp.asarray(_NEG_SENTINEL, cdt)
    true_logit = jnp.sum(jnp.where(mask, logits, zero),
                         axis=1, keepdims=True).astype(jnp.float32)   # (tb,1)
    other_max = jnp.max(jnp.where(mask, neg, logits),
                        axis=1, keepdims=True).astype(jnp.float32)    # (tb,1)

    # f32 from here on (accumulation precision).
    diff = (other_max - true_logit) if target else (true_logit - other_max)
    m = jnp.maximum(diff + jnp.float32(margin), 0.0) - jnp.float32(margin)

    # Zero rows this step does not own: ragged last tile AND duplicate clamped
    # blocks on the core-split axis both land at row_id >= b_true.
    logical_block = p * blocks_per_core + i
    row_id = logical_block * block_rows + jax.lax.broadcasted_iota(
        jnp.int32, (tb, 1), 0)
    m = jnp.where(row_id < b_true, m, 0.0)        # mask BEFORE accumulation

    acc_ref[...] += jnp.sum(m, axis=0, keepdims=True)                 # (1,1)

    # --- finalize: write this core's partial sum -------------------------------
    @pl.when(i == blocks_per_core - 1)
    def _finalize():
        out_ref[...] = jnp.broadcast_to(acc_ref[...][None], out_ref.shape)


def margin_loss(logits, label, *, margin=1.0, target=False, block_rows=None):
    """Pallas implementation of MarginLoss.forward.

    non-target mode: label has shape [B] (per-example class index).
    target mode:     label is a (static) scalar class index for all rows.
    Returns a float32 scalar.
    """
    logits = jnp.asarray(logits)
    if logits.dtype not in (jnp.float32, jnp.bfloat16):
        logits = logits.astype(jnp.float32)
    B, C = logits.shape
    itemsize = logits.dtype.itemsize
    sub = 16 if logits.dtype == jnp.bfloat16 else 8   # sublane granularity

    if target:
        # PyTorch slices with the label, so it is a static Python int; baking it
        # in removes the label stream entirely (cheaper than an SMEM scalar).
        target_label = int(label)
        label_col = None
    else:
        target_label = None
        label_col = jnp.asarray(label, jnp.int32).reshape(B, 1)

    # --- tile sizing: VMEM-padded bytes, no arbitrary row cap -----------------
    lane_pad_c = _round_up(C, 128)                         # VMEM lane padding
    row_vmem = lane_pad_c * itemsize + (0 if target else 128 * 4)   # + label tile
    if block_rows is None:
        budget = 2 * 1024 * 1024                           # per input-buffer set
        tb = max(sub, (budget // row_vmem) // sub * sub)
    else:
        tb = max(sub, _round_up(block_rows, sub))
    # tb is either a sublane multiple (< B) or exactly B (full-dim block).
    tb = min(tb, B)

    g = pl.cdiv(B, tb)        # total row blocks (last one may be ragged)
    nc = 2                    # 2 TensorCores on v7x; a cheap 2-iter loop elsewhere
    gpc = pl.cdiv(g, nc)      # row blocks per core
    grid = (nc, gpc)

    def row_block(p, i):
        # Clamp so no grid step maps to a fully out-of-range block; duplicate
        # steps contribute 0 via the in-kernel row mask.
        return jnp.minimum(p * gpc + i, g - 1)

    body = functools.partial(
        _margin_body, margin=float(margin), target=bool(target),
        target_label=target_label, b_true=B, block_rows=tb,
        blocks_per_core=gpc)

    in_specs = [pl.BlockSpec((tb, C), lambda p, i: (row_block(p, i), 0))]
    inputs = [logits]
    if target:
        kernel = lambda lg, o, a: body(lg, None, o, a)
    else:
        in_specs.append(pl.BlockSpec((tb, 1), lambda p, i: (row_block(p, i), 0)))
        inputs.append(label_col)
        kernel = lambda lg, lb, o, a: body(lg, lb, o, a)

    cost = pl.CostEstimate(
        flops=int(6 * B * C),
        transcendentals=0,
        bytes_accessed=int(B * C * itemsize + (0 if target else B * 4)
                           + nc * 8 * 128 * 4),
    )

    # Per-core partial sums in an (8,128)-aligned output block (bulletproof
    # w.r.t. the TPU tiling constraint); combined + normalized in the wrapper.
    partials = pl.pallas_call(
        kernel,
        out_shape=jax.ShapeDtypeStruct((nc, 8, 128), jnp.float32),
        grid=grid,
        in_specs=in_specs,
        out_specs=pl.BlockSpec((1, 8, 128), lambda p, i: (p, 0, 0)),
        scratch_shapes=[pltpu.VMEM((1, 1), jnp.float32)],
        compiler_params=pltpu.CompilerParams(
            dimension_semantics=("parallel", "arbitrary"),
            vmem_limit_bytes=32 * 1024 * 1024),
        cost_estimate=cost,
    )(*inputs)

    return partials[:, 0, 0].sum() / jnp.float32(B)


def _margin_loss_ref(logits, label, *, margin=1.0, target=False):
    """Pure-JAX reference mirroring the PyTorch semantics."""
    logits = jnp.asarray(logits, jnp.float32)
    B, C = logits.shape
    if not target:
        one_hot = jax.nn.one_hot(jnp.asarray(label, jnp.int32), C, dtype=bool)
        true_logit = jnp.sum(jnp.where(one_hot, logits, 0.0), axis=1)
        other_max = jnp.max(jnp.where(one_hot, -jnp.inf, logits), axis=1)
        diff = true_logit - other_max
    else:
        cls = int(label)
        mask = jnp.arange(C) == cls
        other_max = jnp.max(jnp.where(mask[None, :], -jnp.inf, logits), axis=1)
        diff = other_max - logits[:, cls]
    m = jnp.maximum(diff + margin, 0.0) - margin
    return jnp.mean(m)


if __name__ == "__main__":
    key = jax.random.PRNGKey(0)
    k_logits, k_label = jax.random.split(key)

    # non-target (default) mode
    B, C = 8, 16
    logits = jax.random.normal(k_logits, (B, C), dtype=jnp.float32) * 3.0
    label = jax.random.randint(k_label, (B,), 0, C, dtype=jnp.int32)

    out = jax.block_until_ready(margin_loss(logits, label, margin=1.0))
    ref = _margin_loss_ref(logits, label, margin=1.0)
    assert jnp.allclose(out, ref, atol=1e-5, rtol=1e-5), (out, ref)

    # target mode (single target class for the whole batch)
    tgt = 3
    out_t = jax.block_until_ready(
        margin_loss(logits, tgt, margin=1.0, target=True))
    ref_t = _margin_loss_ref(logits, tgt, margin=1.0, target=True)
    assert jnp.allclose(out_t, ref_t, atol=1e-5, rtol=1e-5), (out_t, ref_t)

    # ragged batch + multi-block grid across both grid axes
    # (B2=50, tb=16 -> 4 row blocks, 2 per core; exercises accumulator,
    #  ragged-tile masking, and clamped duplicate blocks)
    B2, C2 = 50, 40
    logits2 = jax.random.normal(k_logits, (B2, C2), dtype=jnp.float32)
    label2 = jax.random.randint(k_label, (B2,), 0, C2, dtype=jnp.int32)
    out2 = jax.block_until_ready(
        margin_loss(logits2, label2, margin=0.5, block_rows=16))
    ref2 = _margin_loss_ref(logits2, label2, margin=0.5)
    assert jnp.allclose(out2, ref2, atol=1e-5, rtol=1e-5), (out2, ref2)

    # bf16 ingest: selects/reductions run natively in bf16, per-row results in f32
    logits_bf = logits.astype(jnp.bfloat16)
    out_bf = jax.block_until_ready(margin_loss(logits_bf, label, margin=1.0))
    ref_bf = _margin_loss_ref(logits_bf.astype(jnp.float32), label, margin=1.0)
    assert jnp.allclose(out_bf, ref_bf, atol=1e-5, rtol=1e-5), (out_bf, ref_bf)

    print("KERNEL_OK")
</pallas_src>

<mosaic_0001>
module attributes {stable_mosaic.version = 11 : i64} {
  func.func @_lambda_(%arg0: i32, %arg1: i32, %arg2: memref<8x16xf32, #tpu.memory_space<vmem>>, %arg3: memref<8x1xi32, #tpu.memory_space<vmem>>, %arg4: memref<1x8x128xf32, #tpu.memory_space<vmem>>, %arg5: memref<1x1xf32, #tpu.memory_space<vmem>>) attributes {dimension_semantics = [#tpu.dimension_semantics<parallel>, #tpu.dimension_semantics<arbitrary>], iteration_bounds = array<i64: 2, 1>, scalar_prefetch = 0 : i64, scratch_operands = 1 : i64, tpu.core_type = #tpu.core_type<tc>, window_params = [{transform_indices = @transform_0, window_bounds = array<i64: 8, 16>}, {transform_indices = @transform_1, window_bounds = array<i64: 8, 1>}, {transform_indices = @transform_2, window_bounds = array<i64: 1, 8, 128>}]} {
    %c0_i32 = arith.constant 0 : i32
    %0 = arith.cmpi eq, %arg1, %c0_i32 : i32
    %1 = arith.extui %0 : i1 to i32
    %c0_i32_0 = arith.constant 0 : i32
    %2 = arith.cmpi ne, %1, %c0_i32_0 : i32
    scf.if %2 {
      %cst_19 = arith.constant 0.000000e+00 : f32
      %41 = vector.broadcast %cst_19 : f32 to vector<1x1xf32>
      %c0_20 = arith.constant 0 : index
      %c0_21 = arith.constant 0 : index
      %42 = vector.load %arg5[%c0_20, %c0_21] : memref<1x1xf32, #tpu.memory_space<vmem>>, vector<1x1xf32>
      tpu.vector_store %arg5[%c0_20, %c0_21], %41 {strides = array<i32>} : memref<1x1xf32, #tpu.memory_space<vmem>>, vector<1x1xf32>,
    } else {
    }
    %c0 = arith.constant 0 : index
    %c0_1 = arith.constant 0 : index
    %3 = vector.load %arg2[%c0, %c0_1] : memref<8x16xf32, #tpu.memory_space<vmem>>, vector<8x16xf32>
    %4 = tpu.iota {dimensions = array<i32: 1>} : vector<8x16xi32>
    %c0_2 = arith.constant 0 : index
    %c0_3 = arith.constant 0 : index
    %5 = vector.load %arg3[%c0_2, %c0_3] : memref<8x1xi32, #tpu.memory_space<vmem>>, vector<8x1xi32>
    %6 = vector.broadcast %5 : vector<8x1xi32> to vector<8x16xi32>
    %7 = arith.cmpi eq, %4, %6 : vector<8x16xi32>
    %cst = arith.constant 0.000000e+00 : f32
    %8 = vector.broadcast %cst : f32 to vector<8x16xf32>
    %9 = arith.select %7, %3, %8 : vector<8x16xi1>, vector<8x16xf32>
    %cst_4 = arith.constant dense<0.000000e+00> : vector<8xf32>
    %10 = vector.multi_reduction <add>, %9, %cst_4 [1] : vector<8x16xf32> to vector<8xf32>
    %11 = vector.shape_cast %10 : vector<8xf32> to vector<8x1xf32>
    %cst_5 = arith.constant -1.000000e+30 : f32
    %12 = vector.broadcast %cst_5 : f32 to vector<8x16xf32>
    %13 = arith.select %7, %12, %3 : vector<8x16xi1>, vector<8x16xf32>
    %cst_6 = arith.constant dense<0xFF800000> : vector<8xf32>
    %14 = vector.multi_reduction <maximumf>, %13, %cst_6 [1] : vector<8x16xf32> to vector<8xf32>
    %15 = vector.shape_cast %14 : vector<8xf32> to vector<8x1xf32>
    %16 = arith.subf %11, %15 : vector<8x1xf32>
    %cst_7 = arith.constant 1.000000e+00 : f32
    %17 = vector.broadcast %cst_7 : f32 to vector<8x1xf32>
    %18 = arith.addf %16, %17 : vector<8x1xf32>
    %cst_8 = arith.constant 0.000000e+00 : f32
    %19 = vector.broadcast %cst_8 : f32 to vector<8x1xf32>
    %20 = arith.maximumf %18, %19 : vector<8x1xf32>
    %cst_9 = arith.constant 1.000000e+00 : f32
    %21 = vector.broadcast %cst_9 : f32 to vector<8x1xf32>
    %22 = arith.subf %20, %21 : vector<8x1xf32>
    %c1_i32 = arith.constant 1 : i32
    %23 = arith.muli %arg0, %c1_i32 : i32
    %24 = arith.addi %23, %arg1 : i32
    %c8_i32 = arith.constant 8 : i32
    %25 = arith.muli %24, %c8_i32 : i32
    %26 = tpu.iota {dimensions = array<i32: 0>} : vector<8x1xi32>
    %27 = vector.broadcast %25 : i32 to vector<8x1xi32>
    %28 = arith.addi %27, %26 : vector<8x1xi32>
    %c8_i32_10 = arith.constant 8 : i32
    %29 = vector.broadcast %c8_i32_10 : i32 to vector<8x1xi32>
    %30 = arith.cmpi slt, %28, %29 : vector<8x1xi32>
    %cst_11 = arith.constant 0.000000e+00 : f32
    %31 = vector.broadcast %cst_11 : f32 to vector<8x1xf32>
    %32 = arith.select %30, %22, %31 : vector<8x1xi1>, vector<8x1xf32>
    %c0_12 = arith.constant 0 : index
    %c0_13 = arith.constant 0 : index
    %33 = vector.load %arg5[%c0_12, %c0_13] : memref<1x1xf32, #tpu.memory_space<vmem>>, vector<1x1xf32>
    %cst_14 = arith.constant dense<0.000000e+00> : vector<1xf32>
    %34 = vector.multi_reduction <add>, %32, %cst_14 [0] : vector<8x1xf32> to vector<1xf32>
    %35 = vector.shape_cast %34 : vector<1xf32> to vector<1x1xf32>
    %36 = arith.addf %33, %35 : vector<1x1xf32>
    %c0_15 = arith.constant 0 : index
    %c0_16 = arith.constant 0 : index
    %37 = vector.load %arg5[%c0_15, %c0_16] : memref<1x1xf32, #tpu.memory_space<vmem>>, vector<1x1xf32>
    tpu.vector_store %arg5[%c0_15, %c0_16], %36 {strides = array<i32>} : memref<1x1xf32, #tpu.memory_space<vmem>>, vector<1x1xf32>,
    %c0_i32_17 = arith.constant 0 : i32
    %38 = arith.cmpi eq, %arg1, %c0_i32_17 : i32
    %39 = arith.extui %38 : i1 to i32
    %c0_i32_18 = arith.constant 0 : i32
    %40 = arith.cmpi ne, %39, %c0_i32_18 : i32
    scf.if %40 {
      %c0_19 = arith.constant 0 : index
      %c0_20 = arith.constant 0 : index
      %41 = vector.load %arg5[%c0_19, %c0_20] : memref<1x1xf32, #tpu.memory_space<vmem>>, vector<1x1xf32>
      %42 = vector.shape_cast %41 : vector<1x1xf32> to vector<1x1x1xf32>
      %43 = vector.shape_cast %42 : vector<1x1x1xf32> to vector<1x1x1xf32>
      %44 = vector.broadcast %43 : vector<1x1x1xf32> to vector<1x8x128xf32>
      %c0_21 = arith.constant 0 : index
      %c0_22 = arith.constant 0 : index
      %c0_23 = arith.constant 0 : index
      %45 = vector.load %arg4[%c0_21, %c0_22, %c0_23] : memref<1x8x128xf32, #tpu.memory_space<vmem>>, vector<1x8x128xf32>
      tpu.vector_store %arg4[%c0_21, %c0_22, %c0_23], %44 {strides = array<i32>} : memref<1x8x128xf32, #tpu.memory_space<vmem>>, vector<1x8x128xf32>,
    } else {
    }
    return
  }
  func.func @transform_0(%arg0: i32, %arg1: i32) -> (i32, i32) {
    %c1_i32 = arith.constant 1 : i32
    %0 = arith.muli %arg0, %c1_i32 : i32
    %1 = arith.addi %0, %arg1 : i32
    %c0_i32 = arith.constant 0 : i32
    %2 = arith.minsi %1, %c0_i32 : i32
    %c0_i32_0 = arith.constant 0 : i32
    %c0_i32_1 = arith.constant 0 : i32
    return %2, %c0_i32_0 : i32, i32
  }
  func.func @transform_1(%arg0: i32, %arg1: i32) -> (i32, i32) {
    %c1_i32 = arith.constant 1 : i32
    %0 = arith.muli %arg0, %c1_i32 : i32
    %1 = arith.addi %0, %arg1 : i32
    %c0_i32 = arith.constant 0 : i32
    %2 = arith.minsi %1, %c0_i32 : i32
    %c0_i32_0 = arith.constant 0 : i32
    %c0_i32_1 = arith.constant 0 : i32
    return %2, %c0_i32_0 : i32, i32
  }
  func.func @transform_2(%arg0: i32, %arg1: i32) -> (i32, i32, i32) {
    %c0_i32 = arith.constant 0 : i32
    %c0_i32_0 = arith.constant 0 : i32
    %c0_i32_1 = arith.constant 0 : i32
    return %arg0, %c0_i32, %c0_i32_0 : i32, i32, i32
  }
}

</mosaic_0001>

<llo_original>
// kernel: tpu_custom_call.1
$region0: #{tpu_custom_call.1}
  #allocation0 [shape = 'u32[]', space=smem, size = 0x4, offset = 0x4, fixed_abs, tag = 'smem constant byte address 0x4 - core index']
  #allocation1 [shape = 'u32[144,128]{1,0:T(1,128)}', space=vmem, size = 0x12000, scoped, tag = 'internal scratch']
  #allocation2 [shape = 'f32[1,1]{1,0:T(1,128)}', space=vmem, size = 0x200, scoped, tag = 'scratch operand']
  %s0 = inlined_call_operand.vmem [shape: f32[8,16], index: 0, kind: input, shape index: {}]
  %s1 = inlined_call_operand.vmem [shape: s32[8,1], index: 1, kind: input, shape index: {}]
  %s2 = inlined_call_operand.hbm [shape: f32[2,8,128], index: 2, kind: output, shape index: {}]
  %s3 = sld [smem:[#allocation0]]
  $region49: #{tpu_custom_call.1} parent=0
    _
  %s5 = ssub.s32 1, %s3
  %s6 = scalar_select 0, %s5, %s3
  $region1: #{tpu_custom_call.1} parent=0
    #allocation3 [shape = 'u8[8192]{0}', space=vmem, size = 0x2000, scoped, tag = 'output window, operand 0']
    #allocation4 [shape = 's32[2]{0}', space=sflag, size = 0x8, scoped, tag = 'scoped memory for tpu_custom_call.1']
    %7 = vsyncpa [#allocation4], 0
    %s8 = scalar_lea.sflag [#allocation4], 1
    %9 = vsyncpa %s8, 0
    loop: start=0, step=1, limit=4
    $region2: #{tpu_custom_call.1} parent=1 // loop_pre_header
      _
    $region3: #{tpu_custom_call.1} parent=1 // loop_header
      %s11 = sphi 0, %s15
      %p12 = scmp.ge.s32.totalorder %s11, 4
      %s18 = sphi 0, %s30
      %s19 = sphi 0, %s26
      %s20 = sphi 0, %s18
      %s21 = sphi 0, %s19
      %s22 = sphi 0, %s20
      %s23 = sphi 0, %s21
      %s39 = sphi 0, %s41
      %s42 = sphi 0, %s39
      %s43 = sphi 0, %s42
      %s59 = sphi 0, %s43
      %s71 = sphi 0, %s73
      %s74 = sphi 0, %s71
      %s75 = sphi 0, %s74
      %s91 = sphi 0, %s75
      %s97 = sphi 0, %s99
      %s100 = sphi 0, %s97
      %s101 = sphi 0, %s100
      %s117 = sphi 0, %s101
    $region4: #{tpu_custom_call.1} parent=1 // loop_header_branch
      %14 = sbr.rel (%p12) target = $region8
    $region5: #{tpu_custom_call.1} parent=1 // loop_body
      %s16 = ssub.s32 %s11, 1
      %s17 = ssub.s32 %s11, 2
      %s24 = sadd.s32 1, %s19
      %p25 = scmp.ge.s32.totalorder %s24, 1
      %s26 = scalar_select %p25, 0, %s24
      %s27 = sadd.s32 1, %s18
      %s28 = scalar_select %p25, %s27, %s18
      %p29 = scmp.ge.s32.totalorder %s28, 2
      %s30 = scalar_select %p29, 0, %s28
      %s31 = sadd.s32 %s18, %s19
      %p32 = scmp.lt.s32.totalorder %s31, 0
      %s33 = scalar_select %p32, %s31, 0
      %s34 = sadd.s32 %s30, %s26
      %p35 = scmp.lt.s32.totalorder %s34, 0
      %s36 = scalar_select %p35, %s34, 0
      %s37 = ssub.s32 %s33, %s36
      %p38 = scmp.eq.s32.totalorder %s37, 0
      %s40 = sadd.s32 %s39, 1
      %s41 = scalar_select %p38, %s39, %s40
      %p44 = pneg %p38
      %p45 = scmp.eq.s32.totalorder %s11, 1
      %p46 = por %p44, %p45
      %p47 = scmp.ne.s32.totalorder %s39, %s42
      %p48 = scmp.eq.s32.totalorder %s11, 0
      %p49 = por %p47, %p48
      %p50 = scmp.ne.s32.totalorder %s39, %s42
      %p51 = scmp.eq.s32.totalorder %s16, 1
      %p52 = por %p50, %p51
      %p53 = scmp.ne.s32.totalorder %s42, %s43
      %p54 = scmp.eq.s32.totalorder %s16, 0
      %p55 = por %p53, %p54
      %p56 = scmp.ne.s32.totalorder %s42, %s43
      %p57 = scmp.eq.s32.totalorder %s17, 1
      %p58 = por %p56, %p57
      %p60 = scmp.ne.s32.totalorder %s43, %s59
      %p61 = scmp.eq.s32.totalorder %s17, 0
      %p62 = por %p60, %p61
      %s63 = sadd.s32 %s18, %s19
      %p64 = scmp.lt.s32.totalorder %s63, 0
      %s65 = scalar_select %p64, %s63, 0
      %s66 = sadd.s32 %s30, %s26
      %p67 = scmp.lt.s32.totalorder %s66, 0
      %s68 = scalar_select %p67, %s66, 0
      %s69 = ssub.s32 %s65, %s68
      %p70 = scmp.eq.s32.totalorder %s69, 0
      %s72 = sadd.s32 %s71, 1
      %s73 = scalar_select %p70, %s71, %s72
      %p76 = pneg %p70
      %p77 = scmp.eq.s32.totalorder %s11, 1
      %p78 = por %p76, %p77
      %p79 = scmp.ne.s32.totalorder %s71, %s74
      %p80 = scmp.eq.s32.totalorder %s11, 0
      %p81 = por %p79, %p80
      %p82 = scmp.ne.s32.totalorder %s71, %s74
      %p83 = scmp.eq.s32.totalorder %s16, 1
      %p84 = por %p82, %p83
      %p85 = scmp.ne.s32.totalorder %s74, %s75
      %p86 = scmp.eq.s32.totalorder %s16, 0
      %p87 = por %p85, %p86
      %p88 = scmp.ne.s32.totalorder %s74, %s75
      %p89 = scmp.eq.s32.totalorder %s17, 1
      %p90 = por %p88, %p89
      %p92 = scmp.ne.s32.totalorder %s75, %s91
      %p93 = scmp.eq.s32.totalorder %s17, 0
      %p94 = por %p92, %p93
      %s95 = ssub.s32 %s18, %s30
      %p96 = scmp.eq.s32.totalorder %s95, 0
      %s98 = sadd.s32 %s97, 1
      %s99 = scalar_select %p96, %s97, %s98
      %p102 = pneg %p96
      %p103 = scmp.eq.s32.totalorder %s11, 1
      %p104 = por %p102, %p103
      %p105 = scmp.ne.s32.totalorder %s97, %s100
      %p106 = scmp.eq.s32.totalorder %s11, 0
      %p107 = por %p105, %p106
      %p108 = scmp.ne.s32.totalorder %s97, %s100
      %p109 = scmp.eq.s32.totalorder %s16, 1
      %p110 = por %p108, %p109
      %p111 = scmp.ne.s32.totalorder %s100, %s101
      %p112 = scmp.eq.s32.totalorder %s16, 0
      %p113 = por %p111, %p112
      %p114 = scmp.ne.s32.totalorder %s100, %s101
      %p115 = scmp.eq.s32.totalorder %s17, 1
      %p116 = por %p114, %p115
      %p118 = scmp.ne.s32.totalorder %s101, %s117
      %p119 = scmp.eq.s32.totalorder %s17, 0
      %p120 = por %p118, %p119
      %p121 = scmp.le.s32.totalorder 1, %s11
      %p122 = scmp.lt.s32.totalorder %s11, 3
      %p123 = pnand %p121, %p122
      %p124 = pneg %p123
      // Predicated region
      $region9: #{tpu_custom_call.1} parent=5 // pred_check
        _
      $region10: #{tpu_custom_call.1} parent=5 // pred_check_branch
        %126 = sbr.rel (%p123) target = $region12
      $region11: #{tpu_custom_call.1} parent=5 // pred_region
        %s127 = ssub.s32 %s11, 1
      $region12: #{tpu_custom_call.1} parent=5 // pred_fallthru
        _
      %p128 = scmp.lt.s32.totalorder %s11, 2
      // Predicated region
      $region13: #{tpu_custom_call.1} parent=5 // pred_check
        %p129 = pneg %p128
      $region14: #{tpu_custom_call.1} parent=5 // pred_check_branch
        %131 = sbr.rel (%p129) target = $region16
      $region15: #{tpu_custom_call.1} parent=5 // pred_region
        // Predicated region
        $region17: #{tpu_custom_call.1} parent=15 // pred_check
          %p132 = pneg %p49
        $region18: #{tpu_custom_call.1} parent=15 // pred_check_branch
          %134 = sbr.rel (%p132) target = $region20
        $region19: #{tpu_custom_call.1} parent=15 // pred_region
          %s135 = sadd.s32 %s18, %s19
          %p136 = scmp.lt.s32.totalorder %s135, 0
          %s137 = scalar_select %p136, %s135, 0
          %p138 = scmp.lt.s32.totalorder %s137, 0
          %s139 = scalar_select %p138, %s137, 0
          %s140 = smul.addr %s139, 8
          %s141 = scalar_lea.vmem %s0, %s140
          %s142 = sadd.s32 %s18, %s19
          %p143 = scmp.lt.s32.totalorder %s142, 0
          %s144 = scalar_select %p143, %s142, 0
        $region20: #{tpu_custom_call.1} parent=15 // pred_fallthru
          _
        // Predicated region
        $region21: #{tpu_custom_call.1} parent=15 // pred_check
          %p145 = pneg %p81
        $region22: #{tpu_custom_call.1} parent=15 // pred_check_branch
          %147 = sbr.rel (%p145) target = $region24
        $region23: #{tpu_custom_call.1} parent=15 // pred_region
          %s148 = sadd.s32 %s18, %s19
          %p149 = scmp.lt.s32.totalorder %s148, 0
          %s150 = scalar_select %p149, %s148, 0
          %p151 = scmp.lt.s32.totalorder %s150, 0
          %s152 = scalar_select %p151, %s150, 0
          %s153 = smul.addr %s152, 8
          %s154 = scalar_lea.vmem %s1, %s153
          %s155 = sadd.s32 %s18, %s19
          %p156 = scmp.lt.s32.totalorder %s155, 0
          %s157 = scalar_select %p156, %s155, 0
        $region24: #{tpu_custom_call.1} parent=15 // pred_fallthru
          _
      $region16: #{tpu_custom_call.1} parent=5 // pred_fallthru
        _
      %p158 = scmp.le.s32.totalorder 1, %s11
      %p159 = scmp.lt.s32.totalorder %s11, 3
      %p160 = pnand %p158, %p159
      %p161 = pneg %p160
      // Predicated region
      $region25: #{tpu_custom_call.1} parent=5 // pred_check
        _
      $region26: #{tpu_custom_call.1} parent=5 // pred_check_branch
        %163 = sbr.rel (%p160) target = $region28
      $region27: #{tpu_custom_call.1} parent=5 // pred_region
        %s164 = ssub.s32 %s11, 1
        %s165 = sadd.s32 %s20, %s21
        %p166 = scmp.lt.s32.totalorder %s165, 0
        %s167 = scalar_select %p166, %s165, 0
        %p168 = scmp.lt.s32.totalorder %s167, 0
        %s169 = scalar_select %p168, %s167, 0
        %s170 = smul.addr %s169, 8
        %s171 = scalar_lea.vmem %s0, %s170
        %p172 = pneg %p55
        %p173 = pneg %p52
        %s174 = sadd.s32 %s20, %s21
        %p175 = scmp.lt.s32.totalorder %s174, 0
        %s176 = scalar_select %p175, %s174, 0
        %p177 = scmp.lt.s32.totalorder %s176, 0
        %s178 = scalar_select %p177, %s176, 0
        %s179 = smul.addr %s178, 8
        %s180 = scalar_lea.vmem %s1, %s179
        %p181 = pneg %p87
        %p182 = pneg %p84
        %p183 = pneg %p113
        %p184 = pneg %p110
        %s185 = sand.u32 %s100, 1
        %s186 = scalar_lea.sflag [#allocation4], %s185
        %s187 = sand.u32 %s100, 1
        %s188 = smul.addr %s187, 8
        %s189 = scalar_lea.vmem [#allocation3], %s188
        %s190 = sadd.s32 %s20, %s21
        %p191 = scmp.lt.s32.totalorder %s190, 0
        %s192 = scalar_select %p191, %s190, 0
        %p193 = scmp.lt.s32.totalorder %s192, 0
        %s194 = scalar_select %p193, %s192, 0
        %s195 = smul.addr %s194, 8
        %s196 = scalar_lea.vmem %s0, %s195
        %s197 = sadd.s32 %s20, %s21
        %p198 = scmp.lt.s32.totalorder %s197, 0
        %s199 = scalar_select %p198, %s197, 0
        %s200 = sadd.s32 %s20, %s21
        %p201 = scmp.lt.s32.totalorder %s200, 0
        %s202 = scalar_select %p201, %s200, 0
        %p203 = scmp.lt.s32.totalorder %s202, 0
        %s204 = scalar_select %p203, %s202, 0
        %s205 = smul.addr %s204, 8
        %s206 = scalar_lea.vmem %s1, %s205
        %s207 = sadd.s32 %s20, %s21
        %p208 = scmp.lt.s32.totalorder %s207, 0
        %s209 = scalar_select %p208, %s207, 0
        %p210 = scmp.eq.s32.totalorder %s21, 0
        // Predicated region
        $region29: #{tpu_custom_call.1} parent=27 // pred_check
          %p211 = pneg %p210
        $region30: #{tpu_custom_call.1} parent=27 // pred_check_branch
          %213 = sbr.rel (%p211) target = $region32
        $region31: #{tpu_custom_call.1} parent=27 // pred_region
          %vm214 = vcmask 0
          %215 = vst.msk [vmem:[#allocation2] sm:$0x1] %vm214, 0.0
        $region32: #{tpu_custom_call.1} parent=27 // pred_fallthru
          _
        %v216 = vld [vmem:[%s196] sm:$0xff]
        %v217 = vlaneseq
        %v218 = vand.u32 %v217, 127
        %v219 = vld [vmem:[%s206] sm:$0xff]
        %220 = vset.pattern.permute.xlu0 0
        %221 = vperm.xlu0 %220, %v219
        %v222 = vpop.permute.xlu0 %221
        %vm223 = vcmp.eq.s32.totalorder %v218, %v222
        %v224 = vsel %vm223, %v216, 0.0
        %vm225 = vcmask 130048
        %v226 = vsel %vm225, %v224, 0.0
        %227 = vadd.xlane.f32.xlu0 %v226
        %v228 = vpop.xlane.xlu0 %227
        %v229 = vsel %vm223, -1e+30, %v216
        %v230 = vsel %vm225, %v229, -inf
        %231 = vmax.xlane.f32.xlu0 %v230
        %v232 = vpop.xlane.xlu0 %231
        %v233 = vsub.f32 %v228, %v232
        %v234 = vadd.f32 %v233, 1.0
        %v235 = vmax.f32 %v234, 0.0
        %v236 = vsub.f32 %v235, 1.0
        %s237 = sadd.s32 %s20, %s21
        %s238 = smul.u32 %s237, 8
        %v239 = vlaneseq
        %v240 = vshrl.u32 %v239, 7
        %v241 = vstv %s238
        %v242 = vadd.s32 %v241, %v240
        %vm243 = vcmp.lt.s32.totalorder %v242, 8
        %v244 = vsel %vm243, %v236, 0.0
        %v245 = vld [vmem:[#allocation2] sm:$0x1]
        %v246 = vrot.slane %v244, 4
        %v247 = vadd.f32 %v244, %v246
        %v248 = vrot.slane %v247, 2
        %v249 = vadd.f32 %v247, %v248
        %v250 = vrot.slane %v249, 1
        %v251 = vadd.f32 %v249, %v250
        %v252 = vadd.f32 %v245, %v251
        %vm253 = vcmask 0
        %254 = vst.msk [vmem:[#allocation2] sm:$0x1] %vm253, %v252
        // Predicated region
        $region33: #{tpu_custom_call.1} parent=27 // pred_check
          %p255 = pneg %p210
        $region34: #{tpu_custom_call.1} parent=27 // pred_check_branch
          %257 = sbr.rel (%p255) target = $region36
        $region35: #{tpu_custom_call.1} parent=27 // pred_region
          %v258 = vld [vmem:[#allocation2] sm:$0x1]
          %v260 = vlaneseq
          %v261 = vshrl.u32 %v260, 7
          %v262 = vsub.s32 0, %v261
          %v263 = vrot.slane %v258, %v262
          %264 = vset.pattern.permute.xlu0 0
          %265 = vperm.xlu0 %264, %v263
          %v266 = vpop.permute.xlu0 %265
          %268 = vst [vmem:[%s189] sm:$0xff] %v266
        $region36: #{tpu_custom_call.1} parent=27 // pred_fallthru
          _
        %s269 = sand.u32 %s100, 1
        %s270 = scalar_lea.sflag [#allocation4], %s269
        %s271 = sand.u32 %s100, 1
        %s272 = smul.addr %s271, 8
        %s273 = scalar_lea.vmem [#allocation3], %s272
        // Predicated region
        $region37: #{tpu_custom_call.1} parent=27 // pred_check
          %p274 = pneg %p110
        $region38: #{tpu_custom_call.1} parent=27 // pred_check_branch
          %276 = sbr.rel (%p274) target = $region40
        $region39: #{tpu_custom_call.1} parent=27 // pred_region
          %s278 = ssub.s32 128, 128
          %279 = vsyncadd %s270, %s278
          %s280 = smul.addr %s20, 128
          %s281 = scalar_lea.hbm %s2, %s280
          %s283 = sshll.u32 %s273, 4
          %s284 = int_to_ptr.vmem [resolvable:$true] %s283
          %286 = dma.vmem_to_hbm [thread:$0]  %s284, 128, %s281, %s270
        $region40: #{tpu_custom_call.1} parent=27 // pred_fallthru
          _
      $region28: #{tpu_custom_call.1} parent=5 // pred_fallthru
        _
      %p287 = scmp.le.s32.totalorder 2, %s11
      // Predicated region
      $region41: #{tpu_custom_call.1} parent=5 // pred_check
        %p288 = pneg %p287
      $region42: #{tpu_custom_call.1} parent=5 // pred_check_branch
        %290 = sbr.rel (%p288) target = $region44
      $region43: #{tpu_custom_call.1} parent=5 // pred_region
        %s291 = ssub.s32 %s11, 2
        // Predicated region
        $region45: #{tpu_custom_call.1} parent=43 // pred_check
          %p292 = pneg %p116
        $region46: #{tpu_custom_call.1} parent=43 // pred_check_branch
          %294 = sbr.rel (%p292) target = $region48
        $region47: #{tpu_custom_call.1} parent=43 // pred_region
          %s295 = sand.u32 %s101, 1
          %s296 = scalar_lea.sflag [#allocation4], %s295
          %s297 = sand.u32 %s101, 1
          %s298 = smul.addr %s297, 8
          %s299 = scalar_lea.vmem [#allocation3], %s298
          %300 = dma.done %s296, 128
        $region48: #{tpu_custom_call.1} parent=43 // pred_fallthru
          _
      $region44: #{tpu_custom_call.1} parent=5 // pred_fallthru
        _
    $region6: #{tpu_custom_call.1} parent=1 // loop_footer
      %s15 = sadd.s32 1, %s11
    $region7: #{tpu_custom_call.1} parent=1 // loop_footer_branch
      %10 = sbr.rel target = $region3
    $region8: #{tpu_custom_call.1} parent=1 // loop_exit
      _
    %301 = vsyncpa [#allocation4], 1
    %s302 = scalar_lea.sflag [#allocation4], 1
    %303 = vsyncpa %s302, 1

</llo_original>
